<compile_context>
chip_gen: v6e
topology: v6e:2x2x1
jax: 0.10.0
libtpu: 0.0.40
codegen_flags: <defaults>
</compile_context>

<pallas_src>
import jax
import jax.numpy as jnp
from jax.experimental import pallas as pl
from jax.experimental.pallas import tpu as pltpu


def _actor_kernel(x_ref, w_ref, o_ref):
    # x_ref: [TB, fold*ds] folded batch tile
    # w_ref: [fold*ds, fold*da] resident block-diagonal weight
    # o_ref: [TB, fold*da] lane-dense output tile
    o_ref[...] = jnp.dot(
        x_ref[...], w_ref[...], preferred_element_type=jnp.float32
    ).astype(o_ref.dtype)


def _round_up(x: int, m: int) -> int:
    return ((x + m - 1) // m) * m


def _pick_fold(da: int) -> int:
    """Fold factor so fold*da hits the 128-lane vreg width exactly."""
    if da >= 128 or 128 % da != 0:
        return 1  # no clean fold; fall back to unfolded (still correct)
    return 128 // da


def _pick_block_rows(bf: int, fin: int, fout: int, itemsize: int,
                     vmem_cap_bytes: int) -> int:
    """Folded-row tile: multiple of 8 (sublane), sized to the real VMEM budget.

    Accounts for lane padding (round_up to 128) and double-buffered x/o tiles.
    No artificial row clamp: the only ceiling is the per-generation VMEM budget
    (~1/3 of physical VMEM, capped at 40 MiB), so v5e/v6e pick larger tiles
    than v7x automatically.
    """
    per_row_bytes = (_round_up(fin, 128) + _round_up(fout, 128)) * itemsize
    budget = min(40 << 20, vmem_cap_bytes // 3)
    cap = budget // (2 * per_row_bytes)  # 2x: double-buffered in + out tiles
    cap = max(8, (cap // 8) * 8)
    if bf <= cap:
        return bf  # single full-extent block: grid=(1,), zero step overhead
    return cap


def make_actor_forward(weight: jax.Array, *, fold: int | None = None):
    """Prepare Actor params once (transpose + block-diagonal fold) and return
    a `state -> action` callable.

    weight: [da, ds] float32 (PyTorch nn.Linear layout, bias-free).
    """
    da, ds = weight.shape
    f = _pick_fold(da) if fold is None else int(fold)

    # One-time parameter layout fix (not per-call): W.T, then block-diagonal
    # replication so the folded matmul is lane-dense.
    w_t = jnp.asarray(weight).T  # [ds, da]
    w_fold = jnp.kron(jnp.eye(f, dtype=w_t.dtype), w_t) if f > 1 else w_t
    fin, fout = f * ds, f * da  # folded feature dims

    try:
        vmem_cap = int(pltpu.get_tpu_info().vmem_capacity_bytes)
    except Exception:
        vmem_cap = 64 << 20  # conservative fallback (v7x per-TC)

    def forward(state: jax.Array, *, block_b: int | None = None) -> jax.Array:
        """state: [B, ds] -> [B, da]."""
        B, ds_in = state.shape
        assert ds_in == ds, "feature dim mismatch"
        itemsize = state.dtype.itemsize

        # Pad B to a multiple of the fold factor (zero rows, sliced off below).
        Bp = _round_up(B, f)
        x = state if Bp == B else jnp.pad(state, ((0, Bp - B), (0, 0)))
        bf = Bp // f
        xf = x.reshape(bf, fin)

        bb = block_b if block_b is not None else _pick_block_rows(
            bf, fin, fout, itemsize, vmem_cap)
        bb = min(bb, bf)
        grid = (pl.cdiv(bf, bb),)

        # Explicit scoped-VMEM limit so large tiles are legal on v5e (16 MiB
        # default) / v6e (32 MiB default); always <= physical capacity.
        tile_bytes = 2 * bb * (_round_up(fin, 128) + _round_up(fout, 128)) * itemsize
        w_bytes = 2 * fin * _round_up(fout, 128) * itemsize
        vmem_limit = int(min(vmem_cap, tile_bytes + w_bytes + (8 << 20)))

        out_f = pl.pallas_call(
            _actor_kernel,
            out_shape=jax.ShapeDtypeStruct((bf, fout), state.dtype),
            grid_spec=pl.GridSpec(
                grid=grid,
                in_specs=[
                    # Folded activations, batch-tiled (double-buffered).
                    pl.BlockSpec((bb, fin), lambda i: (i, 0)),
                    # Block-diagonal weight stays resident across the grid.
                    pl.BlockSpec((fin, fout), lambda i: (0, 0)),
                ],
                out_specs=pl.BlockSpec((bb, fout), lambda i: (i, 0)),
            ),
            compiler_params=pltpu.CompilerParams(
                # Independent batch tiles -> megacore sharding on v7x when
                # the grid has >=2 steps; harmless no-op otherwise.
                dimension_semantics=("parallel",),
                vmem_limit_bytes=vmem_limit,
            ),
            cost_estimate=pl.CostEstimate(
                flops=2 * bf * fin * fout,
                transcendentals=0,
                bytes_accessed=(bf * fin + fin * fout + bf * fout) * itemsize,
            ),
        )(xf, w_fold)

        # Unfold: [bf, f*da] -> [Bp, da] -> drop padded rows.
        return out_f.reshape(Bp, da)[:B]

    return forward


if __name__ == "__main__":
    # Small shapes consistent with the module: ds = state dim, da = action dim.
    B, ds, da = 8, 32, 16

    key = jax.random.PRNGKey(0)
    k_w, k_x = jax.random.split(key)

    # Deterministic param init: nn.init.normal_(weight, mean=0.0, std=0.001)
    weight = 0.001 * jax.random.normal(k_w, (da, ds), dtype=jnp.float32)
    state = jax.random.normal(k_x, (B, ds), dtype=jnp.float32)

    actor = make_actor_forward(weight)  # params prepared once here

    out = jax.block_until_ready(actor(state))
    ref = state @ weight.T
    assert out.shape == (B, da)
    assert jnp.allclose(out, ref, atol=1e-5, rtol=1e-5), "mismatch vs reference (small)"

    # Second check: exercise the folded, multi-block path (B not a multiple of
    # the fold factor -> padding, forced small folded tile -> ragged last block).
    B2 = 2052
    state2 = jax.random.normal(jax.random.PRNGKey(1), (B2, ds), dtype=jnp.float32)
    out2 = jax.block_until_ready(actor(state2, block_b=64))
    ref2 = state2 @ weight.T
    assert out2.shape == (B2, da)
    assert jnp.allclose(out2, ref2, atol=1e-5, rtol=1e-5), "mismatch vs reference (tiled)"

    print("KERNEL_OK")
</pallas_src>

<mosaic_0001>
module attributes {stable_mosaic.version = 11 : i64} {
  func.func @_actor_kernel(%arg0: i32, %arg1: memref<1x256xf32, #tpu.memory_space<vmem>>, %arg2: memref<256x128xf32, #tpu.memory_space<vmem>>, %arg3: memref<1x128xf32, #tpu.memory_space<vmem>>) attributes {dimension_semantics = [#tpu.dimension_semantics<parallel>], iteration_bounds = array<i64: 1>, scalar_prefetch = 0 : i64, scratch_operands = 0 : i64, tpu.core_type = #tpu.core_type<tc>, window_params = [{transform_indices = @transform_0, window_bounds = array<i64: 1, 256>}, {pipeline_mode = #tpu.pipeline_mode<synchronous>, transform_indices = @transform_1, window_bounds = array<i64: 256, 128>}, {transform_indices = @transform_2, window_bounds = array<i64: 1, 128>}]} {
    %c0 = arith.constant 0 : index
    %c0_0 = arith.constant 0 : index
    %0 = vector.load %arg1[%c0, %c0_0] : memref<1x256xf32, #tpu.memory_space<vmem>>, vector<1x256xf32>
    %c0_1 = arith.constant 0 : index
    %c0_2 = arith.constant 0 : index
    %1 = vector.load %arg2[%c0_1, %c0_2] : memref<256x128xf32, #tpu.memory_space<vmem>>, vector<256x128xf32>
    %cst = arith.constant dense<0.000000e+00> : vector<1x128xf32>
    %2 = tpu.matmul %0, %1, %cst {dimension_numbers = #tpu.dot_dimension_numbers<[1], [0], [0], [1], [0, 0, 1, 1], [], []>} : vector<1x256xf32>, vector<256x128xf32>, vector<1x128xf32> -> vector<1x128xf32>
    %c0_3 = arith.constant 0 : index
    %c0_4 = arith.constant 0 : index
    %3 = vector.load %arg3[%c0_3, %c0_4] : memref<1x128xf32, #tpu.memory_space<vmem>>, vector<1x128xf32>
    tpu.vector_store %arg3[%c0_3, %c0_4], %2 {strides = array<i32>} : memref<1x128xf32, #tpu.memory_space<vmem>>, vector<1x128xf32>,
    return
  }
  func.func @transform_0(%arg0: i32) -> (i32, i32) {
    %c0_i32 = arith.constant 0 : i32
    %c0_i32_0 = arith.constant 0 : i32
    return %arg0, %c0_i32 : i32, i32
  }
  func.func @transform_1(%arg0: i32) -> (i32, i32) {
    %c0_i32 = arith.constant 0 : i32
    %c0_i32_0 = arith.constant 0 : i32
    %c0_i32_1 = arith.constant 0 : i32
    return %c0_i32, %c0_i32_0 : i32, i32
  }
  func.func @transform_2(%arg0: i32) -> (i32, i32) {
    %c0_i32 = arith.constant 0 : i32
    %c0_i32_0 = arith.constant 0 : i32
    return %arg0, %c0_i32 : i32, i32
  }
}

</mosaic_0001>

<llo_original>
// kernel: tpu_custom_call.1
$region0: #{tpu_custom_call.1}
  #allocation0 [shape = 'u32[]', space=smem, size = 0x4, offset = 0x4, fixed_abs, tag = 'smem constant byte address 0x4 - core index']
  #allocation1 [shape = 'u32[144,128]{1,0:T(1,128)}', space=vmem, size = 0x12000, scoped, tag = 'internal scratch']
  %s0 = inlined_call_operand.hbm [shape: f32[1,256], index: 0, kind: input, shape index: {}]
  %s1 = inlined_call_operand.hbm [shape: f32[256,128], index: 1, kind: input, shape index: {}]
  %s2 = inlined_call_operand.hbm [shape: f32[1,128], index: 2, kind: output, shape index: {}]
  %s3 = sld [smem:[#allocation0]]
  $region26: #{tpu_custom_call.1} parent=0
    _
  %s5 = ssub.s32 1, %s3
  %s6 = scalar_select 0, %s5, %s3
  $region1: #{tpu_custom_call.1} parent=0
    #allocation2 [shape = 'u8[1024]{0}', space=vmem, size = 0x400, scoped, tag = 'input window, operand 0, single buffered']
    #allocation3 [shape = 's32[1]{0}', space=sflag, size = 0x4, scoped, tag = 'scoped memory for tpu_custom_call.1']
    #allocation4 [shape = 's32[1]{0}', space=sflag, size = 0x4, scoped, tag = 'scoped memory for tpu_custom_call.1']
    #allocation5 [shape = 'u8[131072]{0}', space=vmem, size = 0x20000, scoped, tag = 'input window, operand 1, single buffered']
    #allocation6 [shape = 's32[1]{0}', space=sflag, size = 0x4, scoped, tag = 'scoped memory for tpu_custom_call.1']
    #allocation7 [shape = 'u8[512]{0}', space=vmem, size = 0x400, scoped, tag = 'output window, operand 0, single buffered']
    %7 = vsyncpa [#allocation3], 0
    %8 = vsyncpa [#allocation6], 0
    %9 = vsyncpa [#allocation4], 0
    // Predicated region
    $region2: #{tpu_custom_call.1} parent=1 // pred_check
      _
    $region3: #{tpu_custom_call.1} parent=1 // pred_check_branch
      %11 = sbr.rel (0) target = $region5
    $region4: #{tpu_custom_call.1} parent=1 // pred_region
      %s13 = ssub.s32 32, 32
      %14 = vsyncadd [#allocation3], %s13
      %s16 = sshll.u32 [#allocation2], 4
      %s17 = int_to_ptr.vmem [resolvable:$true] %s16
      %19 = dma.hbm_to_vmem [thread:$0]  %s0, 32, %s17, [#allocation3]
    $region5: #{tpu_custom_call.1} parent=1 // pred_fallthru
      _
    // Predicated region
    $region6: #{tpu_custom_call.1} parent=1 // pred_check
      _
    $region7: #{tpu_custom_call.1} parent=1 // pred_check_branch
      %21 = sbr.rel (0) target = $region9
    $region8: #{tpu_custom_call.1} parent=1 // pred_region
      %s23 = ssub.s32 4096, 4096
      %24 = vsyncadd [#allocation6], %s23
      %s25 = sshll.u32 [#allocation5], 4
      %s26 = int_to_ptr.vmem [resolvable:$true] %s25
      %31 = dma.hbm_to_vmem [thread:$0]  %s1, 4096, %s26, [#allocation6], 128, 128, 8
    $region9: #{tpu_custom_call.1} parent=1 // pred_fallthru
      _
    // Predicated region
    $region10: #{tpu_custom_call.1} parent=1 // pred_check
      _
    $region11: #{tpu_custom_call.1} parent=1 // pred_check_branch
      %33 = sbr.rel (0) target = $region13
    $region12: #{tpu_custom_call.1} parent=1 // pred_region
      %34 = dma.done [#allocation3], 32
    $region13: #{tpu_custom_call.1} parent=1 // pred_fallthru
      _
    // Predicated region
    $region14: #{tpu_custom_call.1} parent=1 // pred_check
      _
    $region15: #{tpu_custom_call.1} parent=1 // pred_check_branch
      %36 = sbr.rel (0) target = $region17
    $region16: #{tpu_custom_call.1} parent=1 // pred_region
      %37 = dma.done [#allocation6], 4096
    $region17: #{tpu_custom_call.1} parent=1 // pred_fallthru
      _
    %v38 = vld [vmem:[#allocation2] sm:$0x3]
    %v39 = vld [vmem:[#allocation5] sm:$0xff]
    %v40 = vld [vmem:[#allocation5 + $0x8] sm:$0xff]
    %v41 = vld [vmem:[#allocation5 + $0x10] sm:$0xff]
    %v42 = vld [vmem:[#allocation5 + $0x18] sm:$0xff]
    %v43 = vld [vmem:[#allocation5 + $0x20] sm:$0xff]
    %v44 = vld [vmem:[#allocation5 + $0x28] sm:$0xff]
    %v45 = vld [vmem:[#allocation5 + $0x30] sm:$0xff]
    %v46 = vld [vmem:[#allocation5 + $0x38] sm:$0xff]
    %v47 = vld [vmem:[#allocation5 + $0x40] sm:$0xff]
    %v48 = vld [vmem:[#allocation5 + $0x48] sm:$0xff]
    %v49 = vld [vmem:[#allocation5 + $0x50] sm:$0xff]
    %v50 = vld [vmem:[#allocation5 + $0x58] sm:$0xff]
    %v51 = vld [vmem:[#allocation5 + $0x60] sm:$0xff]
    %v52 = vld [vmem:[#allocation5 + $0x68] sm:$0xff]
    %v53 = vld [vmem:[#allocation5 + $0x70] sm:$0xff]
    %v54 = vld [vmem:[#allocation5 + $0x78] sm:$0xff]
    %v55 = vld [vmem:[#allocation5 + $0x80] sm:$0xff]
    %v56 = vld [vmem:[#allocation5 + $0x88] sm:$0xff]
    %v57 = vld [vmem:[#allocation5 + $0x90] sm:$0xff]
    %v58 = vld [vmem:[#allocation5 + $0x98] sm:$0xff]
    %v59 = vld [vmem:[#allocation5 + $0xa0] sm:$0xff]
    %v60 = vld [vmem:[#allocation5 + $0xa8] sm:$0xff]
    %v61 = vld [vmem:[#allocation5 + $0xb0] sm:$0xff]
    %v62 = vld [vmem:[#allocation5 + $0xb8] sm:$0xff]
    %v63 = vld [vmem:[#allocation5 + $0xc0] sm:$0xff]
    %v64 = vld [vmem:[#allocation5 + $0xc8] sm:$0xff]
    %v65 = vld [vmem:[#allocation5 + $0xd0] sm:$0xff]
    %v66 = vld [vmem:[#allocation5 + $0xd8] sm:$0xff]
    %v67 = vld [vmem:[#allocation5 + $0xe0] sm:$0xff]
    %v68 = vld [vmem:[#allocation5 + $0xe8] sm:$0xff]
    %v69 = vld [vmem:[#allocation5 + $0xf0] sm:$0xff]
    %v70 = vld [vmem:[#allocation5 + $0xf8] sm:$0xff]
    %v72 = vlaneseq
    %v73 = vshrl.u32 %v72, 7
    %v74 = vsub.s32 0, %v73
    %v75 = vrot.slane %v38, %v74
    %v76 = vlaneseq
    %v77 = vshrl.u32 %v76, 7
    %v78 = vsub.s32 1, %v77
    %v79 = vrot.slane %v38, %v78
    %82 = vmatprep.subr.mxu0 0.0
    %83 = vmatpush1.msra.mxu0 %v54
    %84 = vmatprep.subr.mxu0 0.0
    %85 = vmatpush1.msra.mxu0 %v53
    %86 = vmatprep.subr.mxu0 0.0
    %87 = vmatpush1.msra.mxu0 %v52
    %88 = vmatprep.subr.mxu0 0.0
    %89 = vmatpush1.msra.mxu0 %v51
    %90 = vmatprep.subr.mxu0 0.0
    %91 = vmatpush1.msra.mxu0 %v50
    %92 = vmatprep.subr.mxu0 0.0
    %93 = vmatpush1.msra.mxu0 %v49
    %94 = vmatprep.subr.mxu0 0.0
    %95 = vmatpush1.msra.mxu0 %v48
    %96 = vmatprep.subr.mxu0 0.0
    %97 = vmatpush1.msra.mxu0 %v47
    %98 = vmatprep.subr.mxu0 0.0
    %99 = vmatpush1.msra.mxu0 %v46
    %100 = vmatprep.subr.mxu0 0.0
    %101 = vmatpush1.msra.mxu0 %v45
    %102 = vmatprep.subr.mxu0 0.0
    %103 = vmatpush1.msra.mxu0 %v44
    %104 = vmatprep.subr.mxu0 0.0
    %105 = vmatpush1.msra.mxu0 %v43
    %106 = vmatprep.subr.mxu0 0.0
    %107 = vmatpush1.msra.mxu0 %v42
    %108 = vmatprep.subr.mxu0 0.0
    %109 = vmatpush1.msra.mxu0 %v41
    %110 = vmatprep.subr.mxu0 0.0
    %111 = vmatpush1.msra.mxu0 %v40
    %112 = vmatprep.subr.mxu0 0.0
    %113 = vmatpush1.msra.mxu0 %v39
    %114 = vmatprep.subr.mxu0 0.0
    %115 = vmatpush2.msra.mxu0 %v70
    %116 = vmatprep.subr.mxu0 0.0
    %117 = vmatpush2.msra.mxu0 %v69
    %118 = vmatprep.subr.mxu0 0.0
    %119 = vmatpush2.msra.mxu0 %v68
    %120 = vmatprep.subr.mxu0 0.0
    %121 = vmatpush2.msra.mxu0 %v67
    %122 = vmatprep.subr.mxu0 0.0
    %123 = vmatpush2.msra.mxu0 %v66
    %124 = vmatprep.subr.mxu0 0.0
    %125 = vmatpush2.msra.mxu0 %v65
    %126 = vmatprep.subr.mxu0 0.0
    %127 = vmatpush2.msra.mxu0 %v64
    %128 = vmatprep.subr.mxu0 0.0
    %129 = vmatpush2.msra.mxu0 %v63
    %130 = vmatprep.subr.mxu0 0.0
    %131 = vmatpush2.msra.mxu0 %v62
    %132 = vmatprep.subr.mxu0 0.0
    %133 = vmatpush2.msra.mxu0 %v61
    %134 = vmatprep.subr.mxu0 0.0
    %135 = vmatpush2.msra.mxu0 %v60
    %136 = vmatprep.subr.mxu0 0.0
    %137 = vmatpush2.msra.mxu0 %v59
    %138 = vmatprep.subr.mxu0 0.0
    %139 = vmatpush2.msra.mxu0 %v58
    %140 = vmatprep.subr.mxu0 0.0
    %141 = vmatpush2.msra.mxu0 %v57
    %142 = vmatprep.subr.mxu0 0.0
    %143 = vmatpush2.msra.mxu0 %v56
    %144 = vmatprep.subr.mxu0 0.0
    %145 = vmatpush2.msra.mxu0 %v55
    %146 = vmatprep.mubr.f32.mxu0 %v79
    %147 = vmatmul.mubr.f32.gmra.mxu0 %v75
    %v148 = vpop.f32.mrf.mxu0
    %v149 = vadd.f32 0.0, %v148
    %v150 = vpop.f32.mrf.mxu0
    %151 = vdwg.mxu0
    %152 = vst [vmem:[#allocation7] sm:$0x1] %v149
    // Predicated region
    $region18: #{tpu_custom_call.1} parent=1 // pred_check
      _
    $region19: #{tpu_custom_call.1} parent=1 // pred_check_branch
      %154 = sbr.rel (0) target = $region21
    $region20: #{tpu_custom_call.1} parent=1 // pred_region
      %s156 = ssub.s32 16, 16
      %157 = vsyncadd [#allocation4], %s156
      %s159 = sshll.u32 [#allocation7], 4
      %s160 = int_to_ptr.vmem [resolvable:$true] %s159
      %162 = dma.vmem_to_hbm [thread:$0]  %s160, 16, %s2, [#allocation4]
    $region21: #{tpu_custom_call.1} parent=1 // pred_fallthru
      _
    // Predicated region
    $region22: #{tpu_custom_call.1} parent=1 // pred_check
      _
    $region23: #{tpu_custom_call.1} parent=1 // pred_check_branch
      %164 = sbr.rel (0) target = $region25
    $region24: #{tpu_custom_call.1} parent=1 // pred_region
      %165 = dma.done [#allocation4], 16
    $region25: #{tpu_custom_call.1} parent=1 // pred_fallthru
      _
    %166 = vsyncpa [#allocation3], 1
    %167 = vsyncpa [#allocation6], 1
    %168 = vsyncpa [#allocation4], 1

</llo_original>
